<compile_context>
chip_gen: v6e
topology: v6e:2x2x1
jax: 0.10.0
libtpu: 0.0.40
codegen_flags: <defaults>
</compile_context>

<pallas_src>
import functools
import math

import jax
import jax.numpy as jnp
from jax.experimental import pallas as pl
from jax.experimental.pallas import tpu as pltpu


def _round_up(x, m):
    return ((x + m - 1) // m) * m


def _sublane_align(dtype):
    # (8,128) tiles for 32-bit, (16,128) for bf16, (32,128) for 8-bit.
    return max(8, 32 // jnp.dtype(dtype).itemsize)


# ----------------------------- kernel bodies --------------------------------

def _sage_kernel_gcn(agg_ref, w_ref, out_ref, *, cdt):
    acc = jnp.dot(agg_ref[...].astype(cdt), w_ref[...],
                  preferred_element_type=jnp.float32)
    out_ref[...] = jnp.clip(acc, 0.0, 6.0).astype(out_ref.dtype)


def _sage_kernel_merged(self_ref, agg_ref, w_ref, out_ref, *, k, cdt,
                        concat_in_vmem):
    # relu6( [self ; agg] @ Wt )  -- fused concat, f32 MXU accumulate.
    xs = self_ref[...].astype(cdt)
    xa = agg_ref[...].astype(cdt)
    if concat_in_vmem:
        # lane-aligned (k % 128 == 0) small-K case: one K=2k dot.
        x = jnp.concatenate([xs, xa], axis=-1)
        acc = jnp.dot(x, w_ref[...], preferred_element_type=jnp.float32)
    else:
        acc = jnp.dot(xs, w_ref[:k, :], preferred_element_type=jnp.float32)
        acc = acc + jnp.dot(xa, w_ref[k:, :], preferred_element_type=jnp.float32)
    out_ref[...] = jnp.clip(acc, 0.0, 6.0).astype(out_ref.dtype)


def _sage_kernel_split(self_ref, agg_ref, w1_ref, w2_ref, out_ref, *, cdt):
    # Fallback when k is not sublane-aligned: two separate weight refs.
    acc = jnp.dot(self_ref[...].astype(cdt), w1_ref[...],
                  preferred_element_type=jnp.float32)
    acc = acc + jnp.dot(agg_ref[...].astype(cdt), w2_ref[...],
                        preferred_element_type=jnp.float32)
    out_ref[...] = jnp.clip(acc, 0.0, 6.0).astype(out_ref.dtype)


# ------------------------------- wrapper -------------------------------------

def prepare_sage_weight(weight, compute_dtype=jnp.float32):
    """Hoisted, once-per-layer weight prep.

    weight: (out_size, k_total)  ->  (k_total, out_p) transposed, lane-padded
    (out_p = round_up(out_size, 128)) in the compute dtype.
    """
    out_size = weight.shape[0]
    out_p = _round_up(max(out_size, 128), 128)
    w = weight.astype(compute_dtype)
    if out_p != out_size:
        w = jnp.pad(w, ((0, out_p - out_size), (0, 0)))
    return jnp.asarray(w.T)


def sage_layer_forward(self_feats, aggregate_feats, weight, gcn=False,
                       tm=None, compute_dtype=jnp.float32,
                       out_dtype=jnp.float32, prepared_weight_t=None,
                       return_padded=False):
    """Pallas implementation of SageLayer.forward.

    self_feats:      (N, input_size)
    aggregate_feats: (N, input_size)
    weight:          (out_size, input_size if gcn else 2*input_size)
    returns:         (N, out_size) in out_dtype (or (N, out_p) if return_padded)
    """
    n, k = aggregate_feats.shape
    out_size = weight.shape[0]
    k_total = k if gcn else 2 * k
    assert weight.shape[1] == k_total, "weight shape mismatch"

    if prepared_weight_t is None:
        wt = prepare_sage_weight(weight, compute_dtype)
    else:
        wt = prepared_weight_t
    assert wt.shape[0] == k_total
    cdt = jnp.dtype(wt.dtype)
    out_p = wt.shape[1]
    out_dt = jnp.dtype(out_dtype)

    feats = (aggregate_feats,) if gcn else (self_feats, aggregate_feats)
    n_feat = len(feats)

    # ---- row tile sizing ----------------------------------------------------
    row_align = max([_sublane_align(f.dtype) for f in feats]
                    + [_sublane_align(out_dt)])
    n_align = _round_up(n, row_align)
    feat_row_bytes = sum(jnp.dtype(f.dtype).itemsize for f in feats) * k
    out_row_bytes = out_p * out_dt.itemsize

    if tm is None:
        # Target ~2 MiB of feature bytes per grid step (small GraphSAGE K would
        # otherwise be per-step-overhead bound), clamped to [512, 2048] rows.
        tm = max(512, min((2 << 20) // max(feat_row_bytes, 1), 2048))
        # Keep >= 4 grid steps when N allows: >= 2 steps per TensorCore on v7x
        # and enough steps for DMA/compute overlap on single-TC v5e/v6e.
        min_steps = 4
        if n_align >= min_steps * row_align:
            tm = min(tm, _round_up(pl.cdiv(n_align, min_steps), row_align))
    tm = max(row_align, _round_up(min(int(tm), n_align), row_align))

    # ---- VMEM budget (generation-aware) --------------------------------------
    try:
        vmem_cap = int(pltpu.get_tpu_info().vmem_capacity_bytes)
    except Exception:
        vmem_cap = 64 << 20      # safe on every generation
    vmem_budget = (vmem_cap * 7) // 8   # headroom for Mosaic internal scratch

    weight_vmem = 2 * k_total * out_p * cdt.itemsize   # conservative (2 buffers)
    per_row = (2 * feat_row_bytes          # double-buffered feature tiles
               + 2 * out_row_bytes         # double-buffered output tiles
               + n_feat * k * cdt.itemsize # in-kernel casted copies
               + out_p * 4)                # f32 accumulator slack
    avail = vmem_budget - weight_vmem - (2 << 20)
    if avail > 0:
        tm_vmem = max(row_align, (avail // per_row) // row_align * row_align)
        tm = min(tm, int(tm_vmem))
    # TODO(synk): for very large input_size the resident weight alone can exceed
    # VMEM (esp. v7x's 64 MiB); add a K-blocked reduction grid axis ("arbitrary")
    # with an f32 VMEM accumulator instead of holding the whole weight resident.

    grid = (pl.cdiv(n, tm),)

    # ---- kernel / inputs selection -------------------------------------------
    if gcn:
        kernel = functools.partial(_sage_kernel_gcn, cdt=cdt)
        inputs = (aggregate_feats, wt)
        feat_specs = [pl.BlockSpec((tm, k), lambda i: (i, 0))]
        w_shapes = [(k_total, out_p)]
    elif k % 8 == 0:
        concat_in_vmem = (k % 128 == 0) and (2 * k <= 512)
        kernel = functools.partial(_sage_kernel_merged, k=k, cdt=cdt,
                                   concat_in_vmem=concat_in_vmem)
        inputs = (self_feats, aggregate_feats, wt)
        feat_specs = [pl.BlockSpec((tm, k), lambda i: (i, 0)),
                      pl.BlockSpec((tm, k), lambda i: (i, 0))]
        w_shapes = [(k_total, out_p)]
    else:
        kernel = functools.partial(_sage_kernel_split, cdt=cdt)
        inputs = (self_feats, aggregate_feats, wt[:k, :], wt[k:, :])
        feat_specs = [pl.BlockSpec((tm, k), lambda i: (i, 0)),
                      pl.BlockSpec((tm, k), lambda i: (i, 0))]
        w_shapes = [(k, out_p), (k, out_p)]

    vmem_need = weight_vmem + per_row * tm
    vmem_limit = int(min(vmem_budget, max(vmem_need + (4 << 20), 32 << 20)))

    feat_bytes = sum(f.size * jnp.dtype(f.dtype).itemsize for f in feats)
    cost = pl.CostEstimate(
        flops=int(2 * n * k_total * out_size),
        transcendentals=0,
        bytes_accessed=int(feat_bytes + k_total * out_p * cdt.itemsize
                           + n * out_p * out_dt.itemsize))

    def _run(single_buffer_weights):
        w_specs = []
        for shp in w_shapes:
            kwargs = {}
            if single_buffer_weights:
                # constant index map -> one resident buffer is enough
                kwargs["pipeline_mode"] = pl.Buffered(1)
            w_specs.append(pl.BlockSpec(shp, lambda i: (0, 0), **kwargs))
        return pl.pallas_call(
            kernel,
            out_shape=jax.ShapeDtypeStruct((n, out_p), out_dt),
            grid_spec=pltpu.PrefetchScalarGridSpec(
                num_scalar_prefetch=0,
                grid=grid,
                in_specs=feat_specs + w_specs,
                out_specs=pl.BlockSpec((tm, out_p), lambda i: (i, 0)),
            ),
            compiler_params=pltpu.CompilerParams(
                dimension_semantics=("parallel",),
                vmem_limit_bytes=vmem_limit),
            cost_estimate=cost,
        )(*inputs)

    if hasattr(pl, "Buffered"):
        try:
            out_padded = _run(True)
        except Exception:
            out_padded = _run(False)
    else:
        out_padded = _run(False)

    if return_padded or out_p == out_size:
        return out_padded
    return out_padded[:, :out_size]


def init_sage_weight(key, input_size, out_size, gcn=False):
    """Deterministic Xavier-uniform init matching nn.init.xavier_uniform_."""
    in_dim = input_size if gcn else 2 * input_size
    bound = math.sqrt(6.0 / (in_dim + out_size))
    return jax.random.uniform(key, (out_size, in_dim), dtype=jnp.float32,
                              minval=-bound, maxval=bound)


def _reference(self_feats, aggregate_feats, weight, gcn=False):
    combined = aggregate_feats if gcn else jnp.concatenate(
        [self_feats, aggregate_feats], axis=1)
    logits = jnp.dot(combined, weight.T, precision=jax.lax.Precision.HIGHEST)
    return jnp.clip(logits, 0.0, 6.0)


if __name__ == "__main__":
    key = jax.random.PRNGKey(0)

    # ---- case 1: tiny shapes, prepared (hoisted) weight ----------------------
    input_size, out_size, n_nodes = 32, 32, 8
    k_w, k_self, k_agg = jax.random.split(key, 3)
    weight = init_sage_weight(k_w, input_size, out_size)
    self_feats = jax.random.normal(k_self, (n_nodes, input_size), jnp.float32)
    agg_feats = jax.random.normal(k_agg, (n_nodes, input_size), jnp.float32)
    wt_prepared = prepare_sage_weight(weight)          # done once per layer

    out = jax.block_until_ready(
        sage_layer_forward(self_feats, agg_feats, weight,
                           prepared_weight_t=wt_prepared))
    ref = _reference(self_feats, agg_feats, weight)
    assert out.shape == (n_nodes, out_size)
    assert jnp.allclose(out, ref, atol=2e-4, rtol=2e-4), "f32 (tiny) mismatch"

    # bf16 compute (f32 MXU accumulate); features cast in-kernel, not in HBM.
    out_bf16 = jax.block_until_ready(
        sage_layer_forward(self_feats, agg_feats, weight,
                           compute_dtype=jnp.bfloat16))
    assert out_bf16.shape == (n_nodes, out_size)
    assert jnp.allclose(out_bf16, ref, atol=1e-1, rtol=1e-1), "bf16 mismatch"

    # ---- case 2: non-aligned N / out_size, multi-step grid --------------------
    input_size2, out_size2, n_nodes2 = 48, 40, 200
    k_w2, k_s2, k_a2 = jax.random.split(jax.random.PRNGKey(1), 3)
    weight2 = init_sage_weight(k_w2, input_size2, out_size2)
    self2 = jax.random.normal(k_s2, (n_nodes2, input_size2), jnp.float32)
    agg2 = jax.random.normal(k_a2, (n_nodes2, input_size2), jnp.float32)
    out2 = jax.block_until_ready(sage_layer_forward(self2, agg2, weight2))
    ref2 = _reference(self2, agg2, weight2)
    assert out2.shape == (n_nodes2, out_size2)
    assert jnp.allclose(out2, ref2, atol=2e-4, rtol=2e-4), "f32 (case 2) mismatch"

    # ---- case 3: gcn=True path ------------------------------------------------
    weight_g = init_sage_weight(jax.random.PRNGKey(2), input_size, out_size,
                                gcn=True)
    out_g = jax.block_until_ready(
        sage_layer_forward(self_feats, agg_feats, weight_g, gcn=True))
    ref_g = _reference(self_feats, agg_feats, weight_g, gcn=True)
    assert out_g.shape == (n_nodes, out_size)
    assert jnp.allclose(out_g, ref_g, atol=2e-4, rtol=2e-4), "gcn mismatch"

    # ---- case 4: lane-aligned K -> in-VMEM concat, single dot ------------------
    input_size4, out_size4, n_nodes4 = 128, 64, 256
    k_w4, k_s4, k_a4 = jax.random.split(jax.random.PRNGKey(3), 3)
    weight4 = init_sage_weight(k_w4, input_size4, out_size4)
    self4 = jax.random.normal(k_s4, (n_nodes4, input_size4), jnp.float32)
    agg4 = jax.random.normal(k_a4, (n_nodes4, input_size4), jnp.float32)
    out4 = jax.block_until_ready(sage_layer_forward(self4, agg4, weight4))
    ref4 = _reference(self4, agg4, weight4)
    assert out4.shape == (n_nodes4, out_size4)
    assert jnp.allclose(out4, ref4, atol=2e-4, rtol=2e-4), "f32 (case 4) mismatch"

    # ---- case 5: k not sublane-aligned -> split-weight fallback ----------------
    input_size5, out_size5, n_nodes5 = 20, 24, 64
    k_w5, k_s5, k_a5 = jax.random.split(jax.random.PRNGKey(4), 3)
    weight5 = init_sage_weight(k_w5, input_size5, out_size5)
    self5 = jax.random.normal(k_s5, (n_nodes5, input_size5), jnp.float32)
    agg5 = jax.random.normal(k_a5, (n_nodes5, input_size5), jnp.float32)
    out5 = jax.block_until_ready(sage_layer_forward(self5, agg5, weight5))
    ref5 = _reference(self5, agg5, weight5)
    assert out5.shape == (n_nodes5, out_size5)
    assert jnp.allclose(out5, ref5, atol=2e-4, rtol=2e-4), "f32 (case 5) mismatch"

    print("KERNEL_OK")
</pallas_src>

<mosaic_0001>
module attributes {stable_mosaic.version = 11 : i64} {
  func.func @_sage_kernel_merged(%arg0: i32, %arg1: memref<8x32xf32, #tpu.memory_space<vmem>>, %arg2: memref<8x32xf32, #tpu.memory_space<vmem>>, %arg3: memref<64x128xf32, #tpu.memory_space<vmem>>, %arg4: memref<8x128xf32, #tpu.memory_space<vmem>>) attributes {dimension_semantics = [#tpu.dimension_semantics<parallel>], iteration_bounds = array<i64: 1>, scalar_prefetch = 0 : i64, scratch_operands = 0 : i64, tpu.core_type = #tpu.core_type<tc>, window_params = [{transform_indices = @transform_0, window_bounds = array<i64: 8, 32>}, {transform_indices = @transform_1, window_bounds = array<i64: 8, 32>}, {pipeline_mode = #tpu.pipeline_mode<synchronous>, transform_indices = @transform_2, window_bounds = array<i64: 64, 128>}, {transform_indices = @transform_3, window_bounds = array<i64: 8, 128>}]} {
    %c0 = arith.constant 0 : index
    %c0_0 = arith.constant 0 : index
    %0 = vector.load %arg1[%c0, %c0_0] : memref<8x32xf32, #tpu.memory_space<vmem>>, vector<8x32xf32>
    %c0_1 = arith.constant 0 : index
    %c0_2 = arith.constant 0 : index
    %1 = vector.load %arg2[%c0_1, %c0_2] : memref<8x32xf32, #tpu.memory_space<vmem>>, vector<8x32xf32>
    %c0_3 = arith.constant 0 : index
    %c0_4 = arith.constant 0 : index
    %2 = vector.load %arg3[%c0_3, %c0_4] : memref<64x128xf32, #tpu.memory_space<vmem>>, vector<32x128xf32>
    %cst = arith.constant dense<0.000000e+00> : vector<8x128xf32>
    %3 = tpu.matmul %0, %2, %cst {dimension_numbers = #tpu.dot_dimension_numbers<[1], [0], [0], [1], [0, 0, 1, 1], [], []>} : vector<8x32xf32>, vector<32x128xf32>, vector<8x128xf32> -> vector<8x128xf32>
    %c32 = arith.constant 32 : index
    %c0_5 = arith.constant 0 : index
    %4 = vector.load %arg3[%c32, %c0_5] : memref<64x128xf32, #tpu.memory_space<vmem>>, vector<32x128xf32>
    %cst_6 = arith.constant dense<0.000000e+00> : vector<8x128xf32>
    %5 = tpu.matmul %1, %4, %cst_6 {dimension_numbers = #tpu.dot_dimension_numbers<[1], [0], [0], [1], [0, 0, 1, 1], [], []>} : vector<8x32xf32>, vector<32x128xf32>, vector<8x128xf32> -> vector<8x128xf32>
    %6 = arith.addf %3, %5 : vector<8x128xf32>
    %cst_7 = arith.constant 0.000000e+00 : f32
    %cst_8 = arith.constant 6.000000e+00 : f32
    %7 = vector.broadcast %cst_7 : f32 to vector<8x128xf32>
    %8 = arith.maximumf %7, %6 : vector<8x128xf32>
    %9 = vector.broadcast %cst_8 : f32 to vector<8x128xf32>
    %10 = arith.minimumf %9, %8 : vector<8x128xf32>
    %c0_9 = arith.constant 0 : index
    %c0_10 = arith.constant 0 : index
    %11 = vector.load %arg4[%c0_9, %c0_10] : memref<8x128xf32, #tpu.memory_space<vmem>>, vector<8x128xf32>
    tpu.vector_store %arg4[%c0_9, %c0_10], %10 {strides = array<i32>} : memref<8x128xf32, #tpu.memory_space<vmem>>, vector<8x128xf32>,
    return
  }
  func.func @transform_0(%arg0: i32) -> (i32, i32) {
    %c0_i32 = arith.constant 0 : i32
    %c0_i32_0 = arith.constant 0 : i32
    return %arg0, %c0_i32 : i32, i32
  }
  func.func @transform_1(%arg0: i32) -> (i32, i32) {
    %c0_i32 = arith.constant 0 : i32
    %c0_i32_0 = arith.constant 0 : i32
    return %arg0, %c0_i32 : i32, i32
  }
  func.func @transform_2(%arg0: i32) -> (i32, i32) {
    %c0_i32 = arith.constant 0 : i32
    %c0_i32_0 = arith.constant 0 : i32
    %c0_i32_1 = arith.constant 0 : i32
    return %c0_i32, %c0_i32_0 : i32, i32
  }
  func.func @transform_3(%arg0: i32) -> (i32, i32) {
    %c0_i32 = arith.constant 0 : i32
    %c0_i32_0 = arith.constant 0 : i32
    return %arg0, %c0_i32 : i32, i32
  }
}

module attributes {stable_mosaic.version = 11 : i64} {
  func.func @_sage_kernel_merged(%arg0: i32, %arg1: memref<8x32xf32, #tpu.memory_space<vmem>>, %arg2: memref<8x32xf32, #tpu.memory_space<vmem>>, %arg3: memref<64x128xf32, #tpu.memory_space<vmem>>, %arg4: memref<8x128xf32, #tpu.memory_space<vmem>>) attributes {dimension_semantics = [#tpu.dimension_semantics<parallel>], iteration_bounds = array<i64: 1>, scalar_prefetch = 0 : i64, scratch_operands = 0 : i64, tpu.core_type = #tpu.core_type<tc>, window_params = [{transform_indices = @transform_0, window_bounds = array<i64: 8, 32>}, {transform_indices = @transform_1, window_bounds = array<i64: 8, 32>}, {pipeline_mode = #tpu.pipeline_mode<synchronous>, transform_indices = @transform_2, window_bounds = array<i64: 64, 128>}, {transform_indices = @transform_3, window_bounds = array<i64: 8, 128>}]} {
    %c0 = arith.constant 0 : index
    %c0_0 = arith.constant 0 : index
    %0 = vector.load %arg1[%c0, %c0_0] : memref<8x32xf32, #tpu.memory_space<vmem>>, vector<8x32xf32>
    %c0_1 = arith.constant 0 : index
    %c0_2 = arith.constant 0 : index
    %1 = vector.load %arg2[%c0_1, %c0_2] : memref<8x32xf32, #tpu.memory_space<vmem>>, vector<8x32xf32>
    %c0_3 = arith.constant 0 : index
    %c0_4 = arith.constant 0 : index
    %2 = vector.load %arg3[%c0_3, %c0_4] : memref<64x128xf32, #tpu.memory_space<vmem>>, vector<32x128xf32>
    %cst = arith.constant dense<0.000000e+00> : vector<8x128xf32>
    %3 = tpu.matmul %0, %2, %cst {dimension_numbers = #tpu.dot_dimension_numbers<[1], [0], [0], [1], [0, 0, 1, 1], [], []>} : vector<8x32xf32>, vector<32x128xf32>, vector<8x128xf32> -> vector<8x128xf32>
    %c32 = arith.constant 32 : index
    %c0_5 = arith.constant 0 : index
    %4 = vector.load %arg3[%c32, %c0_5] : memref<64x128xf32, #tpu.memory_space<vmem>>, vector<32x128xf32>
    %cst_6 = arith.constant dense<0.000000e+00> : vector<8x128xf32>
    %5 = tpu.matmul %1, %4, %cst_6 {dimension_numbers = #tpu.dot_dimension_numbers<[1], [0], [0], [1], [0, 0, 1, 1], [], []>} : vector<8x32xf32>, vector<32x128xf32>, vector<8x128xf32> -> vector<8x128xf32>
    %6 = arith.addf %3, %5 : vector<8x128xf32>
    %cst_7 = arith.constant 0.000000e+00 : f32
    %cst_8 = arith.constant 6.000000e+00 : f32
    %7 = vector.broadcast %cst_7 : f32 to vector<8x128xf32>
    %8 = arith.maximumf %7, %6 : vector<8x128xf32>
    %9 = vector.broadcast %cst_8 : f32 to vector<8x128xf32>
    %10 = arith.minimumf %9, %8 : vector<8x128xf32>
    %c0_9 = arith.constant 0 : index
    %c0_10 = arith.constant 0 : index
    %11 = vector.load %arg4[%c0_9, %c0_10] : memref<8x128xf32, #tpu.memory_space<vmem>>, vector<8x128xf32>
    tpu.vector_store %arg4[%c0_9, %c0_10], %10 {strides = array<i32>} : memref<8x128xf32, #tpu.memory_space<vmem>>, vector<8x128xf32>,
    return
  }
  func.func @transform_0(%arg0: i32) -> (i32, i32) {
    %c0_i32 = arith.constant 0 : i32
    %c0_i32_0 = arith.constant 0 : i32
    return %arg0, %c0_i32 : i32, i32
  }
  func.func @transform_1(%arg0: i32) -> (i32, i32) {
    %c0_i32 = arith.constant 0 : i32
    %c0_i32_0 = arith.constant 0 : i32
    return %arg0, %c0_i32 : i32, i32
  }
  func.func @transform_2(%arg0: i32) -> (i32, i32) {
    %c0_i32 = arith.constant 0 : i32
    %c0_i32_0 = arith.constant 0 : i32
    %c0_i32_1 = arith.constant 0 : i32
    return %c0_i32, %c0_i32_0 : i32, i32
  }
  func.func @transform_3(%arg0: i32) -> (i32, i32) {
    %c0_i32 = arith.constant 0 : i32
    %c0_i32_0 = arith.constant 0 : i32
    return %arg0, %c0_i32 : i32, i32
  }
}

</mosaic_0001>

<llo_original>
// kernel: tpu_custom_call.1
$region0: #{tpu_custom_call.1}
  #allocation0 [shape = 'u32[]', space=smem, size = 0x4, offset = 0x4, fixed_abs, tag = 'smem constant byte address 0x4 - core index']
  #allocation1 [shape = 'u32[144,128]{1,0:T(1,128)}', space=vmem, size = 0x12000, scoped, tag = 'internal scratch']
  %s0 = inlined_call_operand.hbm [shape: f32[8,32], index: 0, kind: input, shape index: {}]
  %s1 = inlined_call_operand.hbm [shape: f32[8,32], index: 1, kind: input, shape index: {}]
  %s2 = inlined_call_operand.hbm [shape: f32[64,128], index: 2, kind: input, shape index: {}]
  %s3 = inlined_call_operand.hbm [shape: f32[8,128], index: 3, kind: output, shape index: {}]
  %s4 = sld [smem:[#allocation0]]
  $region34: #{tpu_custom_call.1} parent=0
    _
  %s6 = ssub.s32 1, %s4
  %s7 = scalar_select 0, %s6, %s4
  $region1: #{tpu_custom_call.1} parent=0
    #allocation2 [shape = 'u8[4096]{0}', space=vmem, size = 0x1000, scoped, tag = 'input window, operand 0, single buffered']
    #allocation3 [shape = 's32[1]{0}', space=sflag, size = 0x4, scoped, tag = 'scoped memory for tpu_custom_call.1']
    #allocation4 [shape = 's32[1]{0}', space=sflag, size = 0x4, scoped, tag = 'scoped memory for tpu_custom_call.1']
    #allocation5 [shape = 'u8[4096]{0}', space=vmem, size = 0x1000, scoped, tag = 'input window, operand 1, single buffered']
    #allocation6 [shape = 's32[1]{0}', space=sflag, size = 0x4, scoped, tag = 'scoped memory for tpu_custom_call.1']
    #allocation7 [shape = 'u8[32768]{0}', space=vmem, size = 0x8000, scoped, tag = 'input window, operand 2, single buffered']
    #allocation8 [shape = 'u8[4096]{0}', space=vmem, size = 0x1000, scoped, tag = 'output window, operand 0, single buffered']
    %8 = vsyncpa [#allocation3], 0
    %9 = vsyncpa [#allocation6], 0
    %10 = vsyncpa [#allocation4], 0
    // Predicated region
    $region2: #{tpu_custom_call.1} parent=1 // pred_check
      _
    $region3: #{tpu_custom_call.1} parent=1 // pred_check_branch
      %12 = sbr.rel (0) target = $region5
    $region4: #{tpu_custom_call.1} parent=1 // pred_region
      %s14 = ssub.s32 128, 128
      %15 = vsyncadd [#allocation3], %s14
      %s17 = sshll.u32 [#allocation2], 4
      %s18 = int_to_ptr.vmem [resolvable:$true] %s17
      %20 = dma.hbm_to_vmem [thread:$0]  %s0, 128, %s18, [#allocation3]
    $region5: #{tpu_custom_call.1} parent=1 // pred_fallthru
      _
    // Predicated region
    $region6: #{tpu_custom_call.1} parent=1 // pred_check
      _
    $region7: #{tpu_custom_call.1} parent=1 // pred_check_branch
      %22 = sbr.rel (0) target = $region9
    $region8: #{tpu_custom_call.1} parent=1 // pred_region
      %s24 = ssub.s32 128, 128
      %25 = vsyncadd [#allocation6], %s24
      %s27 = sshll.u32 [#allocation5], 4
      %s28 = int_to_ptr.vmem [resolvable:$true] %s27
      %30 = dma.hbm_to_vmem [thread:$0]  %s1, 128, %s28, [#allocation6]
    $region9: #{tpu_custom_call.1} parent=1 // pred_fallthru
      _
    // Predicated region
    $region10: #{tpu_custom_call.1} parent=1 // pred_check
      _
    $region11: #{tpu_custom_call.1} parent=1 // pred_check_branch
      %32 = sbr.rel (0) target = $region13
    $region12: #{tpu_custom_call.1} parent=1 // pred_region
      %s34 = ssub.s32 1024, 1024
      %35 = vsyncadd [#allocation6], %s34
      %s36 = sshll.u32 [#allocation7], 4
      %s37 = int_to_ptr.vmem [resolvable:$true] %s36
      %42 = dma.hbm_to_vmem [thread:$0]  %s2, 1024, %s37, [#allocation6], 128, 128, 8
    $region13: #{tpu_custom_call.1} parent=1 // pred_fallthru
      _
    // Predicated region
    $region14: #{tpu_custom_call.1} parent=1 // pred_check
      _
    $region15: #{tpu_custom_call.1} parent=1 // pred_check_branch
      %44 = sbr.rel (0) target = $region17
    $region16: #{tpu_custom_call.1} parent=1 // pred_region
      %45 = dma.done [#allocation3], 128
    $region17: #{tpu_custom_call.1} parent=1 // pred_fallthru
      _
    // Predicated region
    $region18: #{tpu_custom_call.1} parent=1 // pred_check
      _
    $region19: #{tpu_custom_call.1} parent=1 // pred_check_branch
      %47 = sbr.rel (0) target = $region21
    $region20: #{tpu_custom_call.1} parent=1 // pred_region
      %48 = dma.done [#allocation6], 128
    $region21: #{tpu_custom_call.1} parent=1 // pred_fallthru
      _
    // Predicated region
    $region22: #{tpu_custom_call.1} parent=1 // pred_check
      _
    $region23: #{tpu_custom_call.1} parent=1 // pred_check_branch
      %50 = sbr.rel (0) target = $region25
    $region24: #{tpu_custom_call.1} parent=1 // pred_region
      %51 = dma.done [#allocation6], 1024
    $region25: #{tpu_custom_call.1} parent=1 // pred_fallthru
      _
    %v52 = vld [vmem:[#allocation2] sm:$0xff]
    %v53 = vld [vmem:[#allocation5] sm:$0xff]
    %v54 = vld [vmem:[#allocation7] sm:$0xff]
    %v55 = vld [vmem:[#allocation7 + $0x8] sm:$0xff]
    %v56 = vld [vmem:[#allocation7 + $0x10] sm:$0xff]
    %v57 = vld [vmem:[#allocation7 + $0x18] sm:$0xff]
    %v58 = vld [vmem:[#allocation7 + $0x20] sm:$0xff]
    %v59 = vld [vmem:[#allocation7 + $0x28] sm:$0xff]
    %v60 = vld [vmem:[#allocation7 + $0x30] sm:$0xff]
    %v61 = vld [vmem:[#allocation7 + $0x38] sm:$0xff]
    %vm62 = vcmask 261120
    %v64 = vsel %vm62, %v53, 0
    %66 = vmatprep.subr.mxu0 0.0
    %67 = vmatpush1.msra.mxu0 0.0
    %68 = vmatprep.subr.mxu0 0.0
    %69 = vmatpush1.msra.mxu0 0.0
    %70 = vmatprep.subr.mxu0 0.0
    %71 = vmatpush1.msra.mxu0 0.0
    %72 = vmatprep.subr.mxu0 0.0
    %73 = vmatpush1.msra.mxu0 0.0
    %74 = vmatprep.subr.mxu0 0.0
    %75 = vmatpush1.msra.mxu0 0.0
    %76 = vmatprep.subr.mxu0 0.0
    %77 = vmatpush1.msra.mxu0 0.0
    %78 = vmatprep.subr.mxu0 0.0
    %79 = vmatpush1.msra.mxu0 0.0
    %80 = vmatprep.subr.mxu0 0.0
    %81 = vmatpush1.msra.mxu0 0.0
    %82 = vmatprep.subr.mxu0 0.0
    %83 = vmatpush1.msra.mxu0 0.0
    %84 = vmatprep.subr.mxu0 0.0
    %85 = vmatpush1.msra.mxu0 0.0
    %86 = vmatprep.subr.mxu0 0.0
    %87 = vmatpush1.msra.mxu0 0.0
    %88 = vmatprep.subr.mxu0 0.0
    %89 = vmatpush1.msra.mxu0 0.0
    %90 = vmatprep.subr.mxu0 0.0
    %91 = vmatpush1.msra.mxu0 %v61
    %92 = vmatprep.subr.mxu0 0.0
    %93 = vmatpush1.msra.mxu0 %v60
    %94 = vmatprep.subr.mxu0 0.0
    %95 = vmatpush1.msra.mxu0 %v59
    %96 = vmatprep.subr.mxu0 0.0
    %97 = vmatpush1.msra.mxu0 %v58
    %98 = vmatprep.subr.mxu0 0.0
    %99 = vmatpush2.msra.mxu0 0.0
    %100 = vmatprep.subr.mxu0 0.0
    %101 = vmatpush2.msra.mxu0 0.0
    %102 = vmatprep.subr.mxu0 0.0
    %103 = vmatpush2.msra.mxu0 0.0
    %104 = vmatprep.subr.mxu0 0.0
    %105 = vmatpush2.msra.mxu0 0.0
    %106 = vmatprep.subr.mxu0 0.0
    %107 = vmatpush2.msra.mxu0 0.0
    %108 = vmatprep.subr.mxu0 0.0
    %109 = vmatpush2.msra.mxu0 0.0
    %110 = vmatprep.subr.mxu0 0.0
    %111 = vmatpush2.msra.mxu0 0.0
    %112 = vmatprep.subr.mxu0 0.0
    %113 = vmatpush2.msra.mxu0 0.0
    %114 = vmatprep.subr.mxu0 0.0
    %115 = vmatpush2.msra.mxu0 0.0
    %116 = vmatprep.subr.mxu0 0.0
    %117 = vmatpush2.msra.mxu0 0.0
    %118 = vmatprep.subr.mxu0 0.0
    %119 = vmatpush2.msra.mxu0 0.0
    %120 = vmatprep.subr.mxu0 0.0
    %121 = vmatpush2.msra.mxu0 0.0
    %122 = vmatprep.subr.mxu0 0.0
    %123 = vmatpush2.msra.mxu0 0.0
    %124 = vmatprep.subr.mxu0 0.0
    %125 = vmatpush2.msra.mxu0 0.0
    %126 = vmatprep.subr.mxu0 0.0
    %127 = vmatpush2.msra.mxu0 0.0
    %128 = vmatprep.subr.mxu0 0.0
    %129 = vmatpush2.msra.mxu0 0.0
    %130 = vmatprep.mubr.f32.mxu0 0.0
    %131 = vmatmul.mubr.f32.gmra.mxu0 %v64
    %v132 = vpop.f32.mrf.mxu0
    %v133 = vadd.f32 0.0, %v132
    %v134 = vpop.f32.mrf.mxu0
    %135 = vdwg.mxu0
    %v137 = vsel %vm62, %v52, 0
    %139 = vmatprep.subr.mxu0 0.0
    %140 = vmatpush1.msra.mxu0 0.0
    %141 = vmatprep.subr.mxu0 0.0
    %142 = vmatpush1.msra.mxu0 0.0
    %143 = vmatprep.subr.mxu0 0.0
    %144 = vmatpush1.msra.mxu0 0.0
    %145 = vmatprep.subr.mxu0 0.0
    %146 = vmatpush1.msra.mxu0 0.0
    %147 = vmatprep.subr.mxu0 0.0
    %148 = vmatpush1.msra.mxu0 0.0
    %149 = vmatprep.subr.mxu0 0.0
    %150 = vmatpush1.msra.mxu0 0.0
    %151 = vmatprep.subr.mxu0 0.0
    %152 = vmatpush1.msra.mxu0 0.0
    %153 = vmatprep.subr.mxu0 0.0
    %154 = vmatpush1.msra.mxu0 0.0
    %155 = vmatprep.subr.mxu0 0.0
    %156 = vmatpush1.msra.mxu0 0.0
    %157 = vmatprep.subr.mxu0 0.0
    %158 = vmatpush1.msra.mxu0 0.0
    %159 = vmatprep.subr.mxu0 0.0
    %160 = vmatpush1.msra.mxu0 0.0
    %161 = vmatprep.subr.mxu0 0.0
    %162 = vmatpush1.msra.mxu0 0.0
    %163 = vmatprep.subr.mxu0 0.0
    %164 = vmatpush1.msra.mxu0 %v57
    %165 = vmatprep.subr.mxu0 0.0
    %166 = vmatpush1.msra.mxu0 %v56
    %167 = vmatprep.subr.mxu0 0.0
    %168 = vmatpush1.msra.mxu0 %v55
    %169 = vmatprep.subr.mxu0 0.0
    %170 = vmatpush1.msra.mxu0 %v54
    %171 = vmatprep.subr.mxu0 0.0
    %172 = vmatpush2.msra.mxu0 0.0
    %173 = vmatprep.subr.mxu0 0.0
    %174 = vmatpush2.msra.mxu0 0.0
    %175 = vmatprep.subr.mxu0 0.0
    %176 = vmatpush2.msra.mxu0 0.0
    %177 = vmatprep.subr.mxu0 0.0
    %178 = vmatpush2.msra.mxu0 0.0
    %179 = vmatprep.subr.mxu0 0.0
    %180 = vmatpush2.msra.mxu0 0.0
    %181 = vmatprep.subr.mxu0 0.0
    %182 = vmatpush2.msra.mxu0 0.0
    %183 = vmatprep.subr.mxu0 0.0
    %184 = vmatpush2.msra.mxu0 0.0
    %185 = vmatprep.subr.mxu0 0.0
    %186 = vmatpush2.msra.mxu0 0.0
    %187 = vmatprep.subr.mxu0 0.0
    %188 = vmatpush2.msra.mxu0 0.0
    %189 = vmatprep.subr.mxu0 0.0
    %190 = vmatpush2.msra.mxu0 0.0
    %191 = vmatprep.subr.mxu0 0.0
    %192 = vmatpush2.msra.mxu0 0.0
    %193 = vmatprep.subr.mxu0 0.0
    %194 = vmatpush2.msra.mxu0 0.0
    %195 = vmatprep.subr.mxu0 0.0
    %196 = vmatpush2.msra.mxu0 0.0
    %197 = vmatprep.subr.mxu0 0.0
    %198 = vmatpush2.msra.mxu0 0.0
    %199 = vmatprep.subr.mxu0 0.0
    %200 = vmatpush2.msra.mxu0 0.0
    %201 = vmatprep.subr.mxu0 0.0
    %202 = vmatpush2.msra.mxu0 0.0
    %203 = vmatprep.mubr.f32.mxu0 0.0
    %204 = vmatmul.mubr.f32.gmra.mxu0 %v137
    %v205 = vpop.f32.mrf.mxu0
    %v206 = vadd.f32 %v133, %v205
    %v207 = vpop.f32.mrf.mxu0
    %208 = vdwg.mxu0
    %v209 = vmax.f32 %v206, 0.0
    %v210 = vmin.f32 %v209, 6.0
    %211 = vst [vmem:[#allocation8] sm:$0xff] %v210
    // Predicated region
    $region26: #{tpu_custom_call.1} parent=1 // pred_check
      _
    $region27: #{tpu_custom_call.1} parent=1 // pred_check_branch
      %213 = sbr.rel (0) target = $region29
    $region28: #{tpu_custom_call.1} parent=1 // pred_region
      %s215 = ssub.s32 128, 128
      %216 = vsyncadd [#allocation4], %s215
      %s218 = sshll.u32 [#allocation8], 4
      %s219 = int_to_ptr.vmem [resolvable:$true] %s218
      %221 = dma.vmem_to_hbm [thread:$0]  %s219, 128, %s3, [#allocation4]
    $region29: #{tpu_custom_call.1} parent=1 // pred_fallthru
      _
    // Predicated region
    $region30: #{tpu_custom_call.1} parent=1 // pred_check
      _
    $region31: #{tpu_custom_call.1} parent=1 // pred_check_branch
      %223 = sbr.rel (0) target = $region33
    $region32: #{tpu_custom_call.1} parent=1 // pred_region
      %224 = dma.done [#allocation4], 128
    $region33: #{tpu_custom_call.1} parent=1 // pred_fallthru
      _
    %225 = vsyncpa [#allocation3], 1
    %226 = vsyncpa [#allocation6], 1
    %227 = vsyncpa [#allocation4], 1

// kernel: tpu_custom_call.1
$region0: #{tpu_custom_call.1}
  #allocation0 [shape = 'u32[]', space=smem, size = 0x4, offset = 0x4, fixed_abs, tag = 'smem constant byte address 0x4 - core index']
  #allocation1 [shape = 'u32[144,128]{1,0:T(1,128)}', space=vmem, size = 0x12000, scoped, tag = 'internal scratch']
  %s0 = inlined_call_operand.hbm [shape: f32[8,32], index: 0, kind: input, shape index: {}]
  %s1 = inlined_call_operand.hbm [shape: f32[8,32], index: 1, kind: input, shape index: {}]
  %s2 = inlined_call_operand.hbm [shape: f32[64,128], index: 2, kind: input, shape index: {}]
  %s3 = inlined_call_operand.hbm [shape: f32[8,128], index: 3, kind: output, shape index: {}]
  %s4 = sld [smem:[#allocation0]]
  $region34: #{tpu_custom_call.1} parent=0
    _
  %s6 = ssub.s32 1, %s4
  %s7 = scalar_select 0, %s6, %s4
  $region1: #{tpu_custom_call.1} parent=0
    #allocation2 [shape = 'u8[4096]{0}', space=vmem, size = 0x1000, scoped, tag = 'input window, operand 0, single buffered']
    #allocation3 [shape = 's32[1]{0}', space=sflag, size = 0x4, scoped, tag = 'scoped memory for tpu_custom_call.1']
    #allocation4 [shape = 's32[1]{0}', space=sflag, size = 0x4, scoped, tag = 'scoped memory for tpu_custom_call.1']
    #allocation5 [shape = 'u8[4096]{0}', space=vmem, size = 0x1000, scoped, tag = 'input window, operand 1, single buffered']
    #allocation6 [shape = 's32[1]{0}', space=sflag, size = 0x4, scoped, tag = 'scoped memory for tpu_custom_call.1']
    #allocation7 [shape = 'u8[32768]{0}', space=vmem, size = 0x8000, scoped, tag = 'input window, operand 2, single buffered']
    #allocation8 [shape = 'u8[4096]{0}', space=vmem, size = 0x1000, scoped, tag = 'output window, operand 0, single buffered']
    %8 = vsyncpa [#allocation3], 0
    %9 = vsyncpa [#allocation6], 0
    %10 = vsyncpa [#allocation4], 0
    // Predicated region
    $region2: #{tpu_custom_call.1} parent=1 // pred_check
      _
    $region3: #{tpu_custom_call.1} parent=1 // pred_check_branch
      %12 = sbr.rel (0) target = $region5
    $region4: #{tpu_custom_call.1} parent=1 // pred_region
      %s14 = ssub.s32 128, 128
      %15 = vsyncadd [#allocation3], %s14
      %s17 = sshll.u32 [#allocation2], 4
      %s18 = int_to_ptr.vmem [resolvable:$true] %s17
      %20 = dma.hbm_to_vmem [thread:$0]  %s0, 128, %s18, [#allocation3]
    $region5: #{tpu_custom_call.1} parent=1 // pred_fallthru
      _
    // Predicated region
    $region6: #{tpu_custom_call.1} parent=1 // pred_check
      _
    $region7: #{tpu_custom_call.1} parent=1 // pred_check_branch
      %22 = sbr.rel (0) target = $region9
    $region8: #{tpu_custom_call.1} parent=1 // pred_region
      %s24 = ssub.s32 128, 128
      %25 = vsyncadd [#allocation6], %s24
      %s27 = sshll.u32 [#allocation5], 4
      %s28 = int_to_ptr.vmem [resolvable:$true] %s27
      %30 = dma.hbm_to_vmem [thread:$0]  %s1, 128, %s28, [#allocation6]
    $region9: #{tpu_custom_call.1} parent=1 // pred_fallthru
      _
    // Predicated region
    $region10: #{tpu_custom_call.1} parent=1 // pred_check
      _
    $region11: #{tpu_custom_call.1} parent=1 // pred_check_branch
      %32 = sbr.rel (0) target = $region13
    $region12: #{tpu_custom_call.1} parent=1 // pred_region
      %s34 = ssub.s32 1024, 1024
      %35 = vsyncadd [#allocation6], %s34
      %s36 = sshll.u32 [#allocation7], 4
      %s37 = int_to_ptr.vmem [resolvable:$true] %s36
      %42 = dma.hbm_to_vmem [thread:$0]  %s2, 1024, %s37, [#allocation6], 128, 128, 8
    $region13: #{tpu_custom_call.1} parent=1 // pred_fallthru
      _
    // Predicated region
    $region14: #{tpu_custom_call.1} parent=1 // pred_check
      _
    $region15: #{tpu_custom_call.1} parent=1 // pred_check_branch
      %44 = sbr.rel (0) target = $region17
    $region16: #{tpu_custom_call.1} parent=1 // pred_region
      %45 = dma.done [#allocation3], 128
    $region17: #{tpu_custom_call.1} parent=1 // pred_fallthru
      _
    // Predicated region
    $region18: #{tpu_custom_call.1} parent=1 // pred_check
      _
    $region19: #{tpu_custom_call.1} parent=1 // pred_check_branch
      %47 = sbr.rel (0) target = $region21
    $region20: #{tpu_custom_call.1} parent=1 // pred_region
      %48 = dma.done [#allocation6], 128
    $region21: #{tpu_custom_call.1} parent=1 // pred_fallthru
      _
    // Predicated region
    $region22: #{tpu_custom_call.1} parent=1 // pred_check
      _
    $region23: #{tpu_custom_call.1} parent=1 // pred_check_branch
      %50 = sbr.rel (0) target = $region25
    $region24: #{tpu_custom_call.1} parent=1 // pred_region
      %51 = dma.done [#allocation6], 1024
    $region25: #{tpu_custom_call.1} parent=1 // pred_fallthru
      _
    %v52 = vld [vmem:[#allocation2] sm:$0xff]
    %v53 = vld [vmem:[#allocation5] sm:$0xff]
    %v54 = vld [vmem:[#allocation7] sm:$0xff]
    %v55 = vld [vmem:[#allocation7 + $0x8] sm:$0xff]
    %v56 = vld [vmem:[#allocation7 + $0x10] sm:$0xff]
    %v57 = vld [vmem:[#allocation7 + $0x18] sm:$0xff]
    %v58 = vld [vmem:[#allocation7 + $0x20] sm:$0xff]
    %v59 = vld [vmem:[#allocation7 + $0x28] sm:$0xff]
    %v60 = vld [vmem:[#allocation7 + $0x30] sm:$0xff]
    %v61 = vld [vmem:[#allocation7 + $0x38] sm:$0xff]
    %vm62 = vcmask 261120
    %v64 = vsel %vm62, %v53, 0
    %66 = vmatprep.subr.mxu0 0.0
    %67 = vmatpush1.msra.mxu0 0.0
    %68 = vmatprep.subr.mxu0 0.0
    %69 = vmatpush1.msra.mxu0 0.0
    %70 = vmatprep.subr.mxu0 0.0
    %71 = vmatpush1.msra.mxu0 0.0
    %72 = vmatprep.subr.mxu0 0.0
    %73 = vmatpush1.msra.mxu0 0.0
    %74 = vmatprep.subr.mxu0 0.0
    %75 = vmatpush1.msra.mxu0 0.0
    %76 = vmatprep.subr.mxu0 0.0
    %77 = vmatpush1.msra.mxu0 0.0
    %78 = vmatprep.subr.mxu0 0.0
    %79 = vmatpush1.msra.mxu0 0.0
    %80 = vmatprep.subr.mxu0 0.0
    %81 = vmatpush1.msra.mxu0 0.0
    %82 = vmatprep.subr.mxu0 0.0
    %83 = vmatpush1.msra.mxu0 0.0
    %84 = vmatprep.subr.mxu0 0.0
    %85 = vmatpush1.msra.mxu0 0.0
    %86 = vmatprep.subr.mxu0 0.0
    %87 = vmatpush1.msra.mxu0 0.0
    %88 = vmatprep.subr.mxu0 0.0
    %89 = vmatpush1.msra.mxu0 0.0
    %90 = vmatprep.subr.mxu0 0.0
    %91 = vmatpush1.msra.mxu0 %v61
    %92 = vmatprep.subr.mxu0 0.0
    %93 = vmatpush1.msra.mxu0 %v60
    %94 = vmatprep.subr.mxu0 0.0
    %95 = vmatpush1.msra.mxu0 %v59
    %96 = vmatprep.subr.mxu0 0.0
    %97 = vmatpush1.msra.mxu0 %v58
    %98 = vmatprep.subr.mxu0 0.0
    %99 = vmatpush2.msra.mxu0 0.0
    %100 = vmatprep.subr.mxu0 0.0
    %101 = vmatpush2.msra.mxu0 0.0
    %102 = vmatprep.subr.mxu0 0.0
    %103 = vmatpush2.msra.mxu0 0.0
    %104 = vmatprep.subr.mxu0 0.0
    %105 = vmatpush2.msra.mxu0 0.0
    %106 = vmatprep.subr.mxu0 0.0
    %107 = vmatpush2.msra.mxu0 0.0
    %108 = vmatprep.subr.mxu0 0.0
    %109 = vmatpush2.msra.mxu0 0.0
    %110 = vmatprep.subr.mxu0 0.0
    %111 = vmatpush2.msra.mxu0 0.0
    %112 = vmatprep.subr.mxu0 0.0
    %113 = vmatpush2.msra.mxu0 0.0
    %114 = vmatprep.subr.mxu0 0.0
    %115 = vmatpush2.msra.mxu0 0.0
    %116 = vmatprep.subr.mxu0 0.0
    %117 = vmatpush2.msra.mxu0 0.0
    %118 = vmatprep.subr.mxu0 0.0
    %119 = vmatpush2.msra.mxu0 0.0
    %120 = vmatprep.subr.mxu0 0.0
    %121 = vmatpush2.msra.mxu0 0.0
    %122 = vmatprep.subr.mxu0 0.0
    %123 = vmatpush2.msra.mxu0 0.0
    %124 = vmatprep.subr.mxu0 0.0
    %125 = vmatpush2.msra.mxu0 0.0
    %126 = vmatprep.subr.mxu0 0.0
    %127 = vmatpush2.msra.mxu0 0.0
    %128 = vmatprep.subr.mxu0 0.0
    %129 = vmatpush2.msra.mxu0 0.0
    %130 = vmatprep.mubr.f32.mxu0 0.0
    %131 = vmatmul.mubr.f32.gmra.mxu0 %v64
    %v132 = vpop.f32.mrf.mxu0
    %v133 = vadd.f32 0.0, %v132
    %v134 = vpop.f32.mrf.mxu0
    %135 = vdwg.mxu0
    %v137 = vsel %vm62, %v52, 0
    %139 = vmatprep.subr.mxu0 0.0
    %140 = vmatpush1.msra.mxu0 0.0
    %141 = vmatprep.subr.mxu0 0.0
    %142 = vmatpush1.msra.mxu0 0.0
    %143 = vmatprep.subr.mxu0 0.0
    %144 = vmatpush1.msra.mxu0 0.0
    %145 = vmatprep.subr.mxu0 0.0
    %146 = vmatpush1.msra.mxu0 0.0
    %147 = vmatprep.subr.mxu0 0.0
    %148 = vmatpush1.msra.mxu0 0.0
    %149 = vmatprep.subr.mxu0 0.0
    %150 = vmatpush1.msra.mxu0 0.0
    %151 = vmatprep.subr.mxu0 0.0
    %152 = vmatpush1.msra.mxu0 0.0
    %153 = vmatprep.subr.mxu0 0.0
    %154 = vmatpush1.msra.mxu0 0.0
    %155 = vmatprep.subr.mxu0 0.0
    %156 = vmatpush1.msra.mxu0 0.0
    %157 = vmatprep.subr.mxu0 0.0
    %158 = vmatpush1.msra.mxu0 0.0
    %159 = vmatprep.subr.mxu0 0.0
    %160 = vmatpush1.msra.mxu0 0.0
    %161 = vmatprep.subr.mxu0 0.0
    %162 = vmatpush1.msra.mxu0 0.0
    %163 = vmatprep.subr.mxu0 0.0
    %164 = vmatpush1.msra.mxu0 %v57
    %165 = vmatprep.subr.mxu0 0.0
    %166 = vmatpush1.msra.mxu0 %v56
    %167 = vmatprep.subr.mxu0 0.0
    %168 = vmatpush1.msra.mxu0 %v55
    %169 = vmatprep.subr.mxu0 0.0
    %170 = vmatpush1.msra.mxu0 %v54
    %171 = vmatprep.subr.mxu0 0.0
    %172 = vmatpush2.msra.mxu0 0.0
    %173 = vmatprep.subr.mxu0 0.0
    %174 = vmatpush2.msra.mxu0 0.0
    %175 = vmatprep.subr.mxu0 0.0
    %176 = vmatpush2.msra.mxu0 0.0
    %177 = vmatprep.subr.mxu0 0.0
    %178 = vmatpush2.msra.mxu0 0.0
    %179 = vmatprep.subr.mxu0 0.0
    %180 = vmatpush2.msra.mxu0 0.0
    %181 = vmatprep.subr.mxu0 0.0
    %182 = vmatpush2.msra.mxu0 0.0
    %183 = vmatprep.subr.mxu0 0.0
    %184 = vmatpush2.msra.mxu0 0.0
    %185 = vmatprep.subr.mxu0 0.0
    %186 = vmatpush2.msra.mxu0 0.0
    %187 = vmatprep.subr.mxu0 0.0
    %188 = vmatpush2.msra.mxu0 0.0
    %189 = vmatprep.subr.mxu0 0.0
    %190 = vmatpush2.msra.mxu0 0.0
    %191 = vmatprep.subr.mxu0 0.0
    %192 = vmatpush2.msra.mxu0 0.0
    %193 = vmatprep.subr.mxu0 0.0
    %194 = vmatpush2.msra.mxu0 0.0
    %195 = vmatprep.subr.mxu0 0.0
    %196 = vmatpush2.msra.mxu0 0.0
    %197 = vmatprep.subr.mxu0 0.0
    %198 = vmatpush2.msra.mxu0 0.0
    %199 = vmatprep.subr.mxu0 0.0
    %200 = vmatpush2.msra.mxu0 0.0
    %201 = vmatprep.subr.mxu0 0.0
    %202 = vmatpush2.msra.mxu0 0.0
    %203 = vmatprep.mubr.f32.mxu0 0.0
    %204 = vmatmul.mubr.f32.gmra.mxu0 %v137
    %v205 = vpop.f32.mrf.mxu0
    %v206 = vadd.f32 %v133, %v205
    %v207 = vpop.f32.mrf.mxu0
    %208 = vdwg.mxu0
    %v209 = vmax.f32 %v206, 0.0
    %v210 = vmin.f32 %v209, 6.0
    %211 = vst [vmem:[#allocation8] sm:$0xff] %v210
    // Predicated region
    $region26: #{tpu_custom_call.1} parent=1 // pred_check
      _
    $region27: #{tpu_custom_call.1} parent=1 // pred_check_branch
      %213 = sbr.rel (0) target = $region29
    $region28: #{tpu_custom_call.1} parent=1 // pred_region
      %s215 = ssub.s32 128, 128
      %216 = vsyncadd [#allocation4], %s215
      %s218 = sshll.u32 [#allocation8], 4
      %s219 = int_to_ptr.vmem [resolvable:$true] %s218
      %221 = dma.vmem_to_hbm [thread:$0]  %s219, 128, %s3, [#allocation4]
    $region29: #{tpu_custom_call.1} parent=1 // pred_fallthru
      _
    // Predicated region
    $region30: #{tpu_custom_call.1} parent=1 // pred_check
      _
    $region31: #{tpu_custom_call.1} parent=1 // pred_check_branch
      %223 = sbr.rel (0) target = $region33
    $region32: #{tpu_custom_call.1} parent=1 // pred_region
      %224 = dma.done [#allocation4], 128
    $region33: #{tpu_custom_call.1} parent=1 // pred_fallthru
      _
    %225 = vsyncpa [#allocation3], 1
    %226 = vsyncpa [#allocation6], 1
    %227 = vsyncpa [#allocation4], 1

</llo_original>
